<compile_context>
chip_gen: v7x
topology: tpu7x:2x2x1
jax: 0.10.0
libtpu: 0.0.40
codegen_flags: <defaults>
</compile_context>

<pallas_src>
import functools

import jax
import jax.numpy as jnp
from jax.experimental import pallas as pl
from jax.experimental.pallas import tpu as pltpu


_HIDDEN = (512, 256, 128, 64, 32)
_LANE = 128        # every layer's output dim is padded to a multiple of this
_SUBLANE = 8       # f32 sublane multiple (batch tiles)
_W_SUBLANE = 16    # bf16 sublane packing: packed-weight row offsets stay 16-aligned


def _round_up(x, m):
    return ((x + m - 1) // m) * m


def _layer_dims(state_size, action_size):
    ins_raw = (state_size,) + _HIDDEN
    outs_raw = _HIDDEN + (action_size,)
    outs_pad = tuple(_round_up(o, _LANE) for o in outs_raw)
    ins_pad = (_round_up(state_size, _W_SUBLANE),) + outs_pad[:-1]
    return ins_raw, outs_raw, ins_pad, outs_pad


def _pack_plan(state_size, action_size):
    """Group layers into one weight slab per distinct padded output width.

    plan[i] = (slab_idx, row_off, in_raw, in_pad, out_raw, out_pad)
    slab_shapes[s] = (rows, lane_width)   (lane widths sorted descending)
    """
    ins_raw, outs_raw, ins_pad, outs_pad = _layer_dims(state_size, action_size)
    widths = sorted(set(outs_pad), reverse=True)          # e.g. [512, 256, 128]
    rows = {w: 0 for w in widths}
    plan = []
    for i in range(len(ins_pad)):
        w = outs_pad[i]
        plan.append((widths.index(w), rows[w], ins_raw[i], ins_pad[i],
                     outs_raw[i], w))
        rows[w] += ins_pad[i]                              # offsets stay 16-aligned
    slab_shapes = tuple((rows[w], w) for w in widths)
    return tuple(plan), slab_shapes


def _qnet_kernel(x_ref, *rest, plan):
    """Full MLP for one batch tile.  rest = (*w_slab_refs, b_ref, o_ref)."""
    *w_refs, b_ref, o_ref = rest
    n = len(plan)
    h = x_ref[...].astype(jnp.bfloat16)                    # (TILE_B, in0_pad) bf16
    for i, (slab, row, _in_raw, in_pad, _out_raw, out_pad) in enumerate(plan):
        w = w_refs[slab][row:row + in_pad, :]              # bf16 view, 16-aligned static slice
        y = jnp.dot(h, w, preferred_element_type=jnp.float32)   # MXU, f32 accumulation
        y = y + b_ref[i:i + 1, :out_pad]                    # f32 bias add (broadcast)
        if i < n - 1:
            h = jnp.maximum(y, 0.0).astype(jnp.bfloat16)    # ReLU in f32, carry bf16
        else:
            h = y                                           # final layer stays f32
    o_ref[...] = h.astype(o_ref.dtype)                      # lane-dense (TILE_B, 128) store


def init_qnetwork_params(key, state_size, action_size, dtype=jnp.float32):
    """PyTorch nn.Linear default init: U[-1/sqrt(fan_in), +1/sqrt(fan_in)]."""
    sizes = (state_size,) + _HIDDEN + (action_size,)
    params = []
    for i in range(len(sizes) - 1):
        fan_in, fan_out = sizes[i], sizes[i + 1]
        key, kw, kb = jax.random.split(key, 3)
        bound = 1.0 / (fan_in ** 0.5)
        w = jax.random.uniform(kw, (fan_in, fan_out), dtype, -bound, bound)
        b = jax.random.uniform(kb, (fan_out,), dtype, -bound, bound)
        params.append((w, b))
    return params


def pack_qnetwork_params(params, state_size, action_size):
    """Pack 6 (w, b) pairs into per-width bf16 weight slabs + one f32 bias slab."""
    plan, slab_shapes = _pack_plan(state_size, action_size)
    slabs = [jnp.zeros(s, jnp.bfloat16) for s in slab_shapes]
    b_width = max(s[1] for s in slab_shapes)
    b_buf = jnp.zeros((len(params), b_width), jnp.float32)
    for i, (w, b) in enumerate(params):
        slab, row, in_raw, _in_pad, out_raw, _out_pad = plan[i]
        slabs[slab] = slabs[slab].at[row:row + in_raw, :out_raw].set(
            w.astype(jnp.bfloat16))
        b_buf = b_buf.at[i, :out_raw].set(b.astype(jnp.float32).reshape(-1))
    return tuple(slabs), b_buf


def _pick_tile_b(batch, max_tile_b):
    if batch >= 256:
        # >= 2 batch tiles so the "parallel" grid axis can feed both v7x cores.
        tile = _round_up(pl.cdiv(batch, 2), _SUBLANE)
    else:
        tile = _round_up(batch, _SUBLANE)
    return max(_SUBLANE, min(max_tile_b, tile))


def qnetwork_forward(x, packed, state_size, action_size, *,
                     max_tile_b=1024, slice_output=True):
    """x: (batch, state_size) f32.  packed: output of pack_qnetwork_params."""
    w_slabs, b_buf = packed
    batch = x.shape[0]
    _, _, ins_pad, outs_pad = _layer_dims(state_size, action_size)
    in0 = ins_pad[0]
    out_pad = outs_pad[-1]

    # Pad only the (tiny) feature axis when state_size isn't a packing multiple.
    if x.shape[1] != in0:
        x = jnp.pad(x, ((0, 0), (0, in0 - x.shape[1])))

    tile_b = _pick_tile_b(batch, max_tile_b)
    grid = (pl.cdiv(batch, tile_b),)

    plan, _ = _pack_plan(state_size, action_size)
    kernel = functools.partial(_qnet_kernel, plan=plan)

    in_specs = [pl.BlockSpec((tile_b, in0), lambda i: (i, 0))]               # batch-tiled x
    in_specs += [pl.BlockSpec(ws.shape, lambda i: (0, 0)) for ws in w_slabs]  # VMEM-resident W
    in_specs += [pl.BlockSpec(b_buf.shape, lambda i: (0, 0))]                # VMEM-resident b

    out = pl.pallas_call(
        kernel,
        out_shape=jax.ShapeDtypeStruct((batch, out_pad), x.dtype),
        grid_spec=pltpu.PrefetchScalarGridSpec(
            num_scalar_prefetch=0,
            grid=grid,
            in_specs=in_specs,
            out_specs=pl.BlockSpec((tile_b, out_pad), lambda i: (i, 0)),
        ),
        compiler_params=pltpu.CompilerParams(
            dimension_semantics=("parallel",),   # megacore-shard batch tiles (v7x)
            vmem_limit_bytes=32 * 1024 * 1024,   # ample headroom for tile_b=1024 on all gens
        ),
    )(x, *w_slabs, b_buf)

    if slice_output:
        return out[:, :action_size]
    # Latency path: padded lanes [action_size:out_pad) are exactly 0.0 (zero
    # weight/bias padding); caller masks/slices itself and we skip an XLA copy.
    return out


def _reference_forward(x, params):
    """Pure-JAX reference mirroring kernel numerics (bf16 weights/activations, f32 accum)."""
    h = x.astype(jnp.bfloat16)
    for i, (w, b) in enumerate(params):
        y = jnp.dot(h, w.astype(jnp.bfloat16),
                    preferred_element_type=jnp.float32) + b.astype(jnp.float32)
        h = jnp.maximum(y, 0.0).astype(jnp.bfloat16) if i < len(params) - 1 else y
    return h


if __name__ == "__main__":
    key = jax.random.PRNGKey(0)
    k_x, k_p, k_x2 = jax.random.split(key, 3)

    state_size, action_size = 8, 4
    params = init_qnetwork_params(k_p, state_size, action_size)
    packed = pack_qnetwork_params(params, state_size, action_size)

    fwd = jax.jit(functools.partial(qnetwork_forward,
                                    state_size=state_size,
                                    action_size=action_size))

    # Small (action-selection style) batch.
    x_small = jax.random.normal(k_x, (2, state_size), jnp.float32)
    out_small = jax.block_until_ready(fwd(x_small, packed))
    ref_small = _reference_forward(x_small, params)
    assert out_small.shape == (2, action_size)
    assert jnp.allclose(out_small, ref_small, atol=2e-3, rtol=2e-3), "small-batch mismatch"

    # Training-style batch: exercises the 2-tile "parallel" grid (300 -> 2 tiles
    # of 152) and a masked partial final batch tile.
    x_big = jax.random.normal(k_x2, (300, state_size), jnp.float32)
    out_big = jax.block_until_ready(fwd(x_big, packed))
    ref_big = _reference_forward(x_big, params)
    assert out_big.shape == (300, action_size)
    assert jnp.allclose(out_big, ref_big, atol=2e-3, rtol=2e-3), "large-batch mismatch"

    print("KERNEL_OK")
</pallas_src>

<mosaic_0001>
module attributes {stable_mosaic.version = 11 : i64} {
  func.func @_qnet_kernel(%arg0: i32, %arg1: memref<8x16xf32, #tpu.memory_space<vmem>>, %arg2: memref<16x512xbf16, #tpu.memory_space<vmem>>, %arg3: memref<512x256xbf16, #tpu.memory_space<vmem>>, %arg4: memref<640x128xbf16, #tpu.memory_space<vmem>>, %arg5: memref<6x512xf32, #tpu.memory_space<vmem>>, %arg6: memref<8x128xf32, #tpu.memory_space<vmem>>) attributes {dimension_semantics = [#tpu.dimension_semantics<parallel>], iteration_bounds = array<i64: 1>, scalar_prefetch = 0 : i64, scratch_operands = 0 : i64, tpu.core_type = #tpu.core_type<tc>, window_params = [{transform_indices = @transform_0, window_bounds = array<i64: 8, 16>}, {pipeline_mode = #tpu.pipeline_mode<synchronous>, transform_indices = @transform_1, window_bounds = array<i64: 16, 512>}, {pipeline_mode = #tpu.pipeline_mode<synchronous>, transform_indices = @transform_2, window_bounds = array<i64: 512, 256>}, {pipeline_mode = #tpu.pipeline_mode<synchronous>, transform_indices = @transform_3, window_bounds = array<i64: 640, 128>}, {pipeline_mode = #tpu.pipeline_mode<synchronous>, transform_indices = @transform_4, window_bounds = array<i64: 6, 512>}, {transform_indices = @transform_5, window_bounds = array<i64: 8, 128>}]} {
    %c0 = arith.constant 0 : index
    %c0_0 = arith.constant 0 : index
    %0 = vector.load %arg1[%c0, %c0_0] : memref<8x16xf32, #tpu.memory_space<vmem>>, vector<8x16xf32>
    %1 = arith.truncf %0 : vector<8x16xf32> to vector<8x16xbf16>
    %c0_1 = arith.constant 0 : index
    %c0_2 = arith.constant 0 : index
    %2 = vector.load %arg2[%c0_1, %c0_2] : memref<16x512xbf16, #tpu.memory_space<vmem>>, vector<16x512xbf16>
    %cst = arith.constant dense<0.000000e+00> : vector<8x512xf32>
    %3 = tpu.matmul %1, %2, %cst {dimension_numbers = #tpu.dot_dimension_numbers<[1], [0], [0], [1], [0, 0, 1, 1], [], []>} : vector<8x16xbf16>, vector<16x512xbf16>, vector<8x512xf32> -> vector<8x512xf32>
    %c0_3 = arith.constant 0 : index
    %c0_4 = arith.constant 0 : index
    %4 = vector.load %arg5[%c0_3, %c0_4] : memref<6x512xf32, #tpu.memory_space<vmem>>, vector<1x512xf32>
    %5 = vector.broadcast %4 : vector<1x512xf32> to vector<8x512xf32>
    %6 = arith.addf %3, %5 : vector<8x512xf32>
    %cst_5 = arith.constant 0.000000e+00 : f32
    %7 = vector.broadcast %cst_5 : f32 to vector<8x512xf32>
    %8 = arith.maximumf %6, %7 : vector<8x512xf32>
    %9 = arith.truncf %8 : vector<8x512xf32> to vector<8x512xbf16>
    %c0_6 = arith.constant 0 : index
    %c0_7 = arith.constant 0 : index
    %10 = vector.load %arg3[%c0_6, %c0_7] : memref<512x256xbf16, #tpu.memory_space<vmem>>, vector<512x256xbf16>
    %cst_8 = arith.constant dense<0.000000e+00> : vector<8x256xf32>
    %11 = tpu.matmul %9, %10, %cst_8 {dimension_numbers = #tpu.dot_dimension_numbers<[1], [0], [0], [1], [0, 0, 1, 1], [], []>} : vector<8x512xbf16>, vector<512x256xbf16>, vector<8x256xf32> -> vector<8x256xf32>
    %c1 = arith.constant 1 : index
    %c0_9 = arith.constant 0 : index
    %12 = vector.load %arg5[%c1, %c0_9] : memref<6x512xf32, #tpu.memory_space<vmem>>, vector<1x256xf32>
    %13 = vector.broadcast %12 : vector<1x256xf32> to vector<8x256xf32>
    %14 = arith.addf %11, %13 : vector<8x256xf32>
    %cst_10 = arith.constant 0.000000e+00 : f32
    %15 = vector.broadcast %cst_10 : f32 to vector<8x256xf32>
    %16 = arith.maximumf %14, %15 : vector<8x256xf32>
    %17 = arith.truncf %16 : vector<8x256xf32> to vector<8x256xbf16>
    %c0_11 = arith.constant 0 : index
    %c0_12 = arith.constant 0 : index
    %18 = vector.load %arg4[%c0_11, %c0_12] : memref<640x128xbf16, #tpu.memory_space<vmem>>, vector<256x128xbf16>
    %cst_13 = arith.constant dense<0.000000e+00> : vector<8x128xf32>
    %19 = tpu.matmul %17, %18, %cst_13 {dimension_numbers = #tpu.dot_dimension_numbers<[1], [0], [0], [1], [0, 0, 1, 1], [], []>} : vector<8x256xbf16>, vector<256x128xbf16>, vector<8x128xf32> -> vector<8x128xf32>
    %c2 = arith.constant 2 : index
    %c0_14 = arith.constant 0 : index
    %20 = vector.load %arg5[%c2, %c0_14] : memref<6x512xf32, #tpu.memory_space<vmem>>, vector<1x128xf32>
    %21 = vector.broadcast %20 : vector<1x128xf32> to vector<8x128xf32>
    %22 = arith.addf %19, %21 : vector<8x128xf32>
    %cst_15 = arith.constant 0.000000e+00 : f32
    %23 = vector.broadcast %cst_15 : f32 to vector<8x128xf32>
    %24 = arith.maximumf %22, %23 : vector<8x128xf32>
    %25 = arith.truncf %24 : vector<8x128xf32> to vector<8x128xbf16>
    %c256 = arith.constant 256 : index
    %c0_16 = arith.constant 0 : index
    %26 = vector.load %arg4[%c256, %c0_16] : memref<640x128xbf16, #tpu.memory_space<vmem>>, vector<128x128xbf16>
    %cst_17 = arith.constant dense<0.000000e+00> : vector<8x128xf32>
    %27 = tpu.matmul %25, %26, %cst_17 {dimension_numbers = #tpu.dot_dimension_numbers<[1], [0], [0], [1], [0, 0, 1, 1], [], []>} : vector<8x128xbf16>, vector<128x128xbf16>, vector<8x128xf32> -> vector<8x128xf32>
    %c3 = arith.constant 3 : index
    %c0_18 = arith.constant 0 : index
    %28 = vector.load %arg5[%c3, %c0_18] : memref<6x512xf32, #tpu.memory_space<vmem>>, vector<1x128xf32>
    %29 = vector.broadcast %28 : vector<1x128xf32> to vector<8x128xf32>
    %30 = arith.addf %27, %29 : vector<8x128xf32>
    %cst_19 = arith.constant 0.000000e+00 : f32
    %31 = vector.broadcast %cst_19 : f32 to vector<8x128xf32>
    %32 = arith.maximumf %30, %31 : vector<8x128xf32>
    %33 = arith.truncf %32 : vector<8x128xf32> to vector<8x128xbf16>
    %c384 = arith.constant 384 : index
    %c0_20 = arith.constant 0 : index
    %34 = vector.load %arg4[%c384, %c0_20] : memref<640x128xbf16, #tpu.memory_space<vmem>>, vector<128x128xbf16>
    %cst_21 = arith.constant dense<0.000000e+00> : vector<8x128xf32>
    %35 = tpu.matmul %33, %34, %cst_21 {dimension_numbers = #tpu.dot_dimension_numbers<[1], [0], [0], [1], [0, 0, 1, 1], [], []>} : vector<8x128xbf16>, vector<128x128xbf16>, vector<8x128xf32> -> vector<8x128xf32>
    %c4 = arith.constant 4 : index
    %c0_22 = arith.constant 0 : index
    %36 = vector.load %arg5[%c4, %c0_22] : memref<6x512xf32, #tpu.memory_space<vmem>>, vector<1x128xf32>
    %37 = vector.broadcast %36 : vector<1x128xf32> to vector<8x128xf32>
    %38 = arith.addf %35, %37 : vector<8x128xf32>
    %cst_23 = arith.constant 0.000000e+00 : f32
    %39 = vector.broadcast %cst_23 : f32 to vector<8x128xf32>
    %40 = arith.maximumf %38, %39 : vector<8x128xf32>
    %41 = arith.truncf %40 : vector<8x128xf32> to vector<8x128xbf16>
    %c512 = arith.constant 512 : index
    %c0_24 = arith.constant 0 : index
    %42 = vector.load %arg4[%c512, %c0_24] : memref<640x128xbf16, #tpu.memory_space<vmem>>, vector<128x128xbf16>
    %cst_25 = arith.constant dense<0.000000e+00> : vector<8x128xf32>
    %43 = tpu.matmul %41, %42, %cst_25 {dimension_numbers = #tpu.dot_dimension_numbers<[1], [0], [0], [1], [0, 0, 1, 1], [], []>} : vector<8x128xbf16>, vector<128x128xbf16>, vector<8x128xf32> -> vector<8x128xf32>
    %c5 = arith.constant 5 : index
    %c0_26 = arith.constant 0 : index
    %44 = vector.load %arg5[%c5, %c0_26] : memref<6x512xf32, #tpu.memory_space<vmem>>, vector<1x128xf32>
    %45 = vector.broadcast %44 : vector<1x128xf32> to vector<8x128xf32>
    %46 = arith.addf %43, %45 : vector<8x128xf32>
    %c0_27 = arith.constant 0 : index
    %c0_28 = arith.constant 0 : index
    %47 = vector.load %arg6[%c0_27, %c0_28] : memref<8x128xf32, #tpu.memory_space<vmem>>, vector<8x128xf32>
    tpu.vector_store %arg6[%c0_27, %c0_28], %46 {strides = array<i32>} : memref<8x128xf32, #tpu.memory_space<vmem>>, vector<8x128xf32>,
    return
  }
  func.func @transform_0(%arg0: i32) -> (i32, i32) {
    %c0_i32 = arith.constant 0 : i32
    %c0_i32_0 = arith.constant 0 : i32
    return %arg0, %c0_i32 : i32, i32
  }
  func.func @transform_1(%arg0: i32) -> (i32, i32) {
    %c0_i32 = arith.constant 0 : i32
    %c0_i32_0 = arith.constant 0 : i32
    %c0_i32_1 = arith.constant 0 : i32
    return %c0_i32, %c0_i32_0 : i32, i32
  }
  func.func @transform_2(%arg0: i32) -> (i32, i32) {
    %c0_i32 = arith.constant 0 : i32
    %c0_i32_0 = arith.constant 0 : i32
    %c0_i32_1 = arith.constant 0 : i32
    return %c0_i32, %c0_i32_0 : i32, i32
  }
  func.func @transform_3(%arg0: i32) -> (i32, i32) {
    %c0_i32 = arith.constant 0 : i32
    %c0_i32_0 = arith.constant 0 : i32
    %c0_i32_1 = arith.constant 0 : i32
    return %c0_i32, %c0_i32_0 : i32, i32
  }
  func.func @transform_4(%arg0: i32) -> (i32, i32) {
    %c0_i32 = arith.constant 0 : i32
    %c0_i32_0 = arith.constant 0 : i32
    %c0_i32_1 = arith.constant 0 : i32
    return %c0_i32, %c0_i32_0 : i32, i32
  }
  func.func @transform_5(%arg0: i32) -> (i32, i32) {
    %c0_i32 = arith.constant 0 : i32
    %c0_i32_0 = arith.constant 0 : i32
    return %arg0, %c0_i32 : i32, i32
  }
}

</mosaic_0001>

<llo_original>
// kernel: qnetwork_forward.1
$region0: #{qnetwork_forward.1}
  #allocation0 [shape = 'u32[]', space=smem, size = 0x4, offset = 0x4, fixed_abs, tag = 'smem constant byte address 0x4 - core index']
  #allocation1 [shape = 'u32[144,128]{1,0:T(1,128)}', space=vmem, size = 0x12000, scoped, tag = 'internal scratch']
  %s0 = inlined_call_operand.vmem [shape: f32[2,16], index: 0, kind: input, shape index: {}]
  %s1 = inlined_call_operand.hbm [shape: bf16[16,512], index: 1, kind: input, shape index: {}]
  %s2 = inlined_call_operand.hbm [shape: bf16[512,256], index: 2, kind: input, shape index: {}]
  %s3 = inlined_call_operand.hbm [shape: bf16[640,128], index: 3, kind: input, shape index: {}]
  %s4 = inlined_call_operand.hbm [shape: f32[6,512], index: 4, kind: input, shape index: {}]
  %s5 = inlined_call_operand.hbm [shape: f32[2,128], index: 5, kind: output, shape index: {}]
  %s6 = sld [smem:[#allocation0]]
  $region46: #{qnetwork_forward.1} parent=0
    _
  %s8 = ssub.s32 1, %s6
  %s9 = scalar_select 0, %s8, %s6
  $region1: #{qnetwork_forward.1} parent=0
    #allocation2 [shape = 'u8[16384]{0}', space=vmem, size = 0x4000, scoped, tag = 'input window, operand 1, single buffered']
    #allocation3 [shape = 's32[1]{0}', space=sflag, size = 0x4, scoped, tag = 'scoped memory for qnetwork_forward.1']
    #allocation4 [shape = 's32[1]{0}', space=sflag, size = 0x4, scoped, tag = 'scoped memory for qnetwork_forward.1']
    #allocation5 [shape = 'u8[262144]{0}', space=vmem, size = 0x40000, scoped, tag = 'input window, operand 2, single buffered']
    #allocation6 [shape = 's32[1]{0}', space=sflag, size = 0x4, scoped, tag = 'scoped memory for qnetwork_forward.1']
    #allocation7 [shape = 'u8[163840]{0}', space=vmem, size = 0x28000, scoped, tag = 'input window, operand 3, single buffered']
    #allocation8 [shape = 'u8[16384]{0}', space=vmem, size = 0x4000, scoped, tag = 'input window, operand 4, single buffered']
    #allocation9 [shape = 's32[1]{0}', space=sflag, size = 0x4, scoped, tag = 'scoped memory for qnetwork_forward.1']
    #allocation10 [shape = 'u8[4096]{0}', space=vmem, size = 0x1000, scoped, tag = 'output window, operand 0, single buffered']
    %10 = vsyncpa [#allocation3], 0
    %11 = vsyncpa [#allocation6], 0
    %12 = vsyncpa [#allocation9], 0
    %13 = vsyncpa [#allocation4], 0
    // Predicated region
    $region2: #{qnetwork_forward.1} parent=1 // pred_check
      _
    $region3: #{qnetwork_forward.1} parent=1 // pred_check_branch
      %15 = sbr.rel (0) target = $region5
    $region4: #{qnetwork_forward.1} parent=1 // pred_region
      _
    $region5: #{qnetwork_forward.1} parent=1 // pred_fallthru
      _
    // Predicated region
    $region6: #{qnetwork_forward.1} parent=1 // pred_check
      _
    $region7: #{qnetwork_forward.1} parent=1 // pred_check_branch
      %17 = sbr.rel (0) target = $region9
    $region8: #{qnetwork_forward.1} parent=1 // pred_region
      %s19 = ssub.s32 512, 512
      %20 = vsyncadd [#allocation3], %s19
      %s21 = sshll.u32 [#allocation2], 4
      %s22 = int_to_ptr.vmem [resolvable:$true] %s21
      %27 = dma.hbm_to_vmem [thread:$0]  %s1, 512, %s22, [#allocation3], 256, 256, 16
    $region9: #{qnetwork_forward.1} parent=1 // pred_fallthru
      _
    // Predicated region
    $region10: #{qnetwork_forward.1} parent=1 // pred_check
      _
    $region11: #{qnetwork_forward.1} parent=1 // pred_check_branch
      %29 = sbr.rel (0) target = $region13
    $region12: #{qnetwork_forward.1} parent=1 // pred_region
      %s31 = ssub.s32 8192, 8192
      %32 = vsyncadd [#allocation6], %s31
      %s33 = sshll.u32 [#allocation5], 4
      %s34 = int_to_ptr.vmem [resolvable:$true] %s33
      %39 = dma.hbm_to_vmem [thread:$0]  %s2, 8192, %s34, [#allocation6], 128, 128, 8
    $region13: #{qnetwork_forward.1} parent=1 // pred_fallthru
      _
    // Predicated region
    $region14: #{qnetwork_forward.1} parent=1 // pred_check
      _
    $region15: #{qnetwork_forward.1} parent=1 // pred_check_branch
      %41 = sbr.rel (0) target = $region17
    $region16: #{qnetwork_forward.1} parent=1 // pred_region
      %s43 = ssub.s32 5120, 5120
      %44 = vsyncadd [#allocation6], %s43
      %s45 = sshll.u32 [#allocation7], 4
      %s46 = int_to_ptr.vmem [resolvable:$true] %s45
      %51 = dma.hbm_to_vmem [thread:$0]  %s3, 5120, %s46, [#allocation6], 64, 64, 4
    $region17: #{qnetwork_forward.1} parent=1 // pred_fallthru
      _
    // Predicated region
    $region18: #{qnetwork_forward.1} parent=1 // pred_check
      _
    $region19: #{qnetwork_forward.1} parent=1 // pred_check_branch
      %53 = sbr.rel (0) target = $region21
    $region20: #{qnetwork_forward.1} parent=1 // pred_region
      %s55 = ssub.s32 512, 512
      %56 = vsyncadd [#allocation9], %s55
      %s58 = sshll.u32 [#allocation8], 4
      %s59 = int_to_ptr.vmem [resolvable:$true] %s58
      %61 = dma.hbm_to_vmem [thread:$0]  %s4, 512, %s59, [#allocation9]
    $region21: #{qnetwork_forward.1} parent=1 // pred_fallthru
      _
    // Predicated region
    $region22: #{qnetwork_forward.1} parent=1 // pred_check
      _
    $region23: #{qnetwork_forward.1} parent=1 // pred_check_branch
      %63 = sbr.rel (0) target = $region25
    $region24: #{qnetwork_forward.1} parent=1 // pred_region
      %64 = dma.done [#allocation3], 512
    $region25: #{qnetwork_forward.1} parent=1 // pred_fallthru
      _
    // Predicated region
    $region26: #{qnetwork_forward.1} parent=1 // pred_check
      _
    $region27: #{qnetwork_forward.1} parent=1 // pred_check_branch
      %66 = sbr.rel (0) target = $region29
    $region28: #{qnetwork_forward.1} parent=1 // pred_region
      %67 = dma.done [#allocation6], 8192
    $region29: #{qnetwork_forward.1} parent=1 // pred_fallthru
      _
    // Predicated region
    $region30: #{qnetwork_forward.1} parent=1 // pred_check
      _
    $region31: #{qnetwork_forward.1} parent=1 // pred_check_branch
      %69 = sbr.rel (0) target = $region33
    $region32: #{qnetwork_forward.1} parent=1 // pred_region
      %70 = dma.done [#allocation6], 5120
    $region33: #{qnetwork_forward.1} parent=1 // pred_fallthru
      _
    // Predicated region
    $region34: #{qnetwork_forward.1} parent=1 // pred_check
      _
    $region35: #{qnetwork_forward.1} parent=1 // pred_check_branch
      %72 = sbr.rel (0) target = $region37
    $region36: #{qnetwork_forward.1} parent=1 // pred_region
      %73 = dma.done [#allocation9], 512
    $region37: #{qnetwork_forward.1} parent=1 // pred_fallthru
      _
    %v75 = vld [vmem:[%s0] sm:$0xff]
    %v76 = vpack.c.bf16 %v75, %v75
    %v77 = vld [vmem:[#allocation2] sm:$0xff]
    %v78 = vld [vmem:[#allocation2 + $0x8] sm:$0xff]
    %v79 = vld [vmem:[#allocation2 + $0x10] sm:$0xff]
    %v80 = vld [vmem:[#allocation2 + $0x18] sm:$0xff]
    %v81 = vld [vmem:[#allocation8] ss:$8 sm:$0xf]
    %v83 = vlaneseq
    %v84 = vshrl.u32 %v83, 7
    %v85 = vsub.s32 0, %v84
    %v86 = vrot.slane %v81, %v85
    %v87 = vlaneseq
    %v88 = vshrl.u32 %v87, 7
    %v89 = vsub.s32 1, %v88
    %v90 = vrot.slane %v81, %v89
    %v91 = vlaneseq
    %v92 = vshrl.u32 %v91, 7
    %v93 = vsub.s32 2, %v92
    %v94 = vrot.slane %v81, %v93
    %v95 = vlaneseq
    %v96 = vshrl.u32 %v95, 7
    %v97 = vsub.s32 3, %v96
    %v98 = vrot.slane %v81, %v97
    %v107 = vunpack.c.l.b16 %v77
    %v108 = vunpack.c.h.b16 %v77
    %v109 = vunpack.c.l.b16 %v78
    %v110 = vunpack.c.h.b16 %v78
    %v111 = vunpack.c.l.b16 %v79
    %v112 = vunpack.c.h.b16 %v79
    %v113 = vunpack.c.l.b16 %v80
    %v114 = vunpack.c.h.b16 %v80
    %v115 = vpack.c.b16 %v111, %v107
    %v116 = vpack.c.b16 %v112, %v108
    %v117 = vpack.c.b16 %v113, %v109
    %v118 = vpack.c.b16 %v114, %v110
    %vm123 = vcmask 130048
    %v125 = vsel %vm123, %v76, 0
    %127 = vmatprep.subr.bf16.mxu0 %v116
    %128 = vmatpush1.bf16.msra.mxu0 %v115
    %129 = vmatprep.subr.bf16.mxu0 0
    %130 = vmatpush1.bf16.msra.mxu0 0
    %131 = vmatprep.subr.bf16.mxu0 0
    %132 = vmatpush1.bf16.msra.mxu0 0
    %133 = vmatprep.subr.bf16.mxu0 0
    %134 = vmatpush1.bf16.msra.mxu0 0
    %135 = vmatprep.subr.bf16.mxu0 0
    %136 = vmatpush1.bf16.msra.mxu0 0
    %137 = vmatprep.subr.bf16.mxu0 0
    %138 = vmatpush1.bf16.msra.mxu0 0
    %139 = vmatprep.subr.bf16.mxu0 0
    %140 = vmatpush1.bf16.msra.mxu0 0
    %141 = vmatprep.subr.bf16.mxu0 0
    %142 = vmatpush1.bf16.msra.mxu0 0
    %143 = vmatprep.subr.bf16.mxu0 0
    %144 = vmatpush1.bf16.msra.mxu0 0
    %145 = vmatprep.subr.bf16.mxu0 0
    %146 = vmatpush1.bf16.msra.mxu0 0
    %147 = vmatprep.subr.bf16.mxu0 0
    %148 = vmatpush1.bf16.msra.mxu0 0
    %149 = vmatprep.subr.bf16.mxu0 0
    %150 = vmatpush1.bf16.msra.mxu0 0
    %151 = vmatprep.subr.bf16.mxu0 0
    %152 = vmatpush1.bf16.msra.mxu0 0
    %153 = vmatprep.subr.bf16.mxu0 0
    %154 = vmatpush1.bf16.msra.mxu0 0
    %155 = vmatprep.subr.bf16.mxu0 0
    %156 = vmatpush1.bf16.msra.mxu0 0
    %157 = vmatprep.subr.bf16.mxu0 0
    %158 = vmatpush1.bf16.msra.mxu0 0
    %159 = vmatprep.mubr.bf16.mxu0 0
    %160 = vmatmul.mubr.bf16.gmra.mrb[0].mxu0 %v125
    %v161 = vpop.f32.mrb[0].mxu0
    %v162 = vadd.f32 %v86, %v161
    %v163 = vpop.f32.mrb[0].mxu0
    %v164 = vadd.f32 %v90, %v163
    %v165 = vpop.f32.mrb[0].mxu0
    %v166 = vpop.f32.mrb[0].mxu0
    %167 = vdwg.mxu0
    %168 = vmatprep.subr.bf16.mxu0 %v118
    %169 = vmatpush1.bf16.msra.mxu0 %v117
    %170 = vmatprep.subr.bf16.mxu0 0
    %171 = vmatpush1.bf16.msra.mxu0 0
    %172 = vmatprep.subr.bf16.mxu0 0
    %173 = vmatpush1.bf16.msra.mxu0 0
    %174 = vmatprep.subr.bf16.mxu0 0
    %175 = vmatpush1.bf16.msra.mxu0 0
    %176 = vmatprep.subr.bf16.mxu0 0
    %177 = vmatpush1.bf16.msra.mxu0 0
    %178 = vmatprep.subr.bf16.mxu0 0
    %179 = vmatpush1.bf16.msra.mxu0 0
    %180 = vmatprep.subr.bf16.mxu0 0
    %181 = vmatpush1.bf16.msra.mxu0 0
    %182 = vmatprep.subr.bf16.mxu0 0
    %183 = vmatpush1.bf16.msra.mxu0 0
    %184 = vmatprep.subr.bf16.mxu0 0
    %185 = vmatpush1.bf16.msra.mxu0 0
    %186 = vmatprep.subr.bf16.mxu0 0
    %187 = vmatpush1.bf16.msra.mxu0 0
    %188 = vmatprep.subr.bf16.mxu0 0
    %189 = vmatpush1.bf16.msra.mxu0 0
    %190 = vmatprep.subr.bf16.mxu0 0
    %191 = vmatpush1.bf16.msra.mxu0 0
    %192 = vmatprep.subr.bf16.mxu0 0
    %193 = vmatpush1.bf16.msra.mxu0 0
    %194 = vmatprep.subr.bf16.mxu0 0
    %195 = vmatpush1.bf16.msra.mxu0 0
    %196 = vmatprep.subr.bf16.mxu0 0
    %197 = vmatpush1.bf16.msra.mxu0 0
    %198 = vmatprep.subr.bf16.mxu0 0
    %199 = vmatpush1.bf16.msra.mxu0 0
    %200 = vmatprep.mubr.bf16.mxu0 0
    %201 = vmatmul.mubr.bf16.gmra.mrb[0].mxu0 %v125
    %v202 = vpop.f32.mrb[0].mxu0
    %v203 = vadd.f32 %v94, %v202
    %v204 = vpop.f32.mrb[0].mxu0
    %v205 = vadd.f32 %v98, %v204
    %v206 = vpop.f32.mrb[0].mxu0
    %v207 = vpop.f32.mrb[0].mxu0
    %208 = vdwg.mxu0
    %v209 = vmax.f32 %v162, 0.0
    %v210 = vmax.f32 %v164, 0.0
    %v211 = vmax.f32 %v203, 0.0
    %v212 = vmax.f32 %v205, 0.0
    %v213 = vpack.c.bf16 %v209, %v209
    %v214 = vpack.c.bf16 %v210, %v210
    %v215 = vpack.c.bf16 %v211, %v211
    %v216 = vpack.c.bf16 %v212, %v212
    %v217 = vld [vmem:[#allocation5] sm:$0xff]
    %v218 = vld [vmem:[#allocation5 + $0x8] sm:$0xff]
    %v219 = vld [vmem:[#allocation5 + $0x10] sm:$0xff]
    %v220 = vld [vmem:[#allocation5 + $0x18] sm:$0xff]
    %v221 = vld [vmem:[#allocation5 + $0x20] sm:$0xff]
    %v222 = vld [vmem:[#allocation5 + $0x28] sm:$0xff]
    %v223 = vld [vmem:[#allocation5 + $0x30] sm:$0xff]
    %v224 = vld [vmem:[#allocation5 + $0x38] sm:$0xff]
    %v225 = vld [vmem:[#allocation5 + $0x40] sm:$0xff]
    %v226 = vld [vmem:[#allocation5 + $0x48] sm:$0xff]
    %v227 = vld [vmem:[#allocation5 + $0x50] sm:$0xff]
    %v228 = vld [vmem:[#allocation5 + $0x58] sm:$0xff]
    %v229 = vld [vmem:[#allocation5 + $0x60] sm:$0xff]
    %v230 = vld [vmem:[#allocation5 + $0x68] sm:$0xff]
    %v231 = vld [vmem:[#allocation5 + $0x70] sm:$0xff]
    %v232 = vld [vmem:[#allocation5 + $0x78] sm:$0xff]
    %v233 = vld [vmem:[#allocation5 + $0x80] sm:$0xff]
    %v234 = vld [vmem:[#allocation5 + $0x88] sm:$0xff]
    %v235 = vld [vmem:[#allocation5 + $0x90] sm:$0xff]
    %v236 = vld [vmem:[#allocation5 + $0x98] sm:$0xff]
    %v237 = vld [vmem:[#allocation5 + $0xa0] sm:$0xff]
    %v238 = vld [vmem:[#allocation5 + $0xa8] sm:$0xff]
    %v239 = vld [vmem:[#allocation5 + $0xb0] sm:$0xff]
    %v240 = vld [vmem:[#allocation5 + $0xb8] sm:$0xff]
    %v241 = vld [vmem:[#allocation5 + $0xc0] sm:$0xff]
    %v242 = vld [vmem:[#allocation5 + $0xc8] sm:$0xff]
    %v243 = vld [vmem:[#allocation5 + $0xd0] sm:$0xff]
    %v244 = vld [vmem:[#allocation5 + $0xd8] sm:$0xff]
    %v245 = vld [vmem:[#allocation5 + $0xe0] sm:$0xff]
    %v246 = vld [vmem:[#allocation5 + $0xe8] sm:$0xff]
    %v247 = vld [vmem:[#allocation5 + $0xf0] sm:$0xff]
    %v248 = vld [vmem:[#allocation5 + $0xf8] sm:$0xff]
    %v249 = vld [vmem:[#allocation5 + $0x100] sm:$0xff]
    %v250 = vld [vmem:[#allocation5 + $0x108] sm:$0xff]
    %v251 = vld [vmem:[#allocation5 + $0x110] sm:$0xff]
    %v252 = vld [vmem:[#allocation5 + $0x118] sm:$0xff]
    %v253 = vld [vmem:[#allocation5 + $0x120] sm:$0xff]
    %v254 = vld [vmem:[#allocation5 + $0x128] sm:$0xff]
    %v255 = vld [vmem:[#allocation5 + $0x130] sm:$0xff]
    %v256 = vld [vmem:[#allocation5 + $0x138] sm:$0xff]
    %v257 = vld [vmem:[#allocation5 + $0x140] sm:$0xff]
    %v258 = vld [vmem:[#allocation5 + $0x148] sm:$0xff]
    %v259 = vld [vmem:[#allocation5 + $0x150] sm:$0xff]
    %v260 = vld [vmem:[#allocation5 + $0x158] sm:$0xff]
    %v261 = vld [vmem:[#allocation5 + $0x160] sm:$0xff]
    %v262 = vld [vmem:[#allocation5 + $0x168] sm:$0xff]
    %v263 = vld [vmem:[#allocation5 + $0x170] sm:$0xff]
    %v264 = vld [vmem:[#allocation5 + $0x178] sm:$0xff]
    %v265 = vld [vmem:[#allocation5 + $0x180] sm:$0xff]
    %v266 = vld [vmem:[#allocation5 + $0x188] sm:$0xff]
    %v267 = vld [vmem:[#allocation5 + $0x190] sm:$0xff]
    %v268 = vld [vmem:[#allocation5 + $0x198] sm:$0xff]
    %v269 = vld [vmem:[#allocation5 + $0x1a0] sm:$0xff]
    %v270 = vld [vmem:[#allocation5 + $0x1a8] sm:$0xff]
    %v271 = vld [vmem:[#allocation5 + $0x1b0] sm:$0xff]
    %v272 = vld [vmem:[#allocation5 + $0x1b8] sm:$0xff]
    %v273 = vld [vmem:[#allocation5 + $0x1c0] sm:$0xff]
    %v274 = vld [vmem:[#allocation5 + $0x1c8] sm:$0xff]
    %v275 = vld [vmem:[#allocation5 + $0x1d0] sm:$0xff]
    %v276 = vld [vmem:[#allocation5 + $0x1d8] sm:$0xff]
    %v277 = vld [vmem:[#allocation5 + $0x1e0] sm:$0xff]
    %v278 = vld [vmem:[#allocation5 + $0x1e8] sm:$0xff]
    %v279 = vld [vmem:[#allocation5 + $0x1f0] sm:$0xff]
    %v280 = vld [vmem:[#allocation5 + $0x1f8] sm:$0xff]
    %s281 = scalar_lea.vmem [#allocation8], 1
    %v282 = vld [vmem:[%s281] ss:$8 sm:$0x3]
    %v284 = vlaneseq
    %v285 = vshrl.u32 %v284, 7
    %v286 = vsub.s32 0, %v285
    %v287 = vrot.slane %v282, %v286
    %v288 = vlaneseq
    %v289 = vshrl.u32 %v288, 7
    %v290 = vsub.s32 1, %v289
    %v291 = vrot.slane %v282, %v290
    %v358 = vunpack.c.l.b16 %v217
    %v359 = vunpack.c.h.b16 %v217
    %v360 = vunpack.c.l.b16 %v218
    %v361 = vunpack.c.h.b16 %v218
    %v362 = vunpack.c.l.b16 %v219
    %v363 = vunpack.c.h.b16 %v219
    %v364 = vunpack.c.l.b16 %v220
    %v365 = vunpack.c.h.b16 %v220
    %v366 = vunpack.c.l.b16 %v221
    %v367 = vunpack.c.h.b16 %v221
    %v368 = vunpack.c.l.b16 %v222
    %v369 = vunpack.c.h.b16 %v222
    %v370 = vunpack.c.l.b16 %v223
    %v371 = vunpack.c.h.b16 %v223
    %v372 = vunpack.c.l.b16 %v224
    %v373 = vunpack.c.h.b16 %v224
    %v374 = vunpack.c.l.b16 %v225
    %v375 = vunpack.c.h.b16 %v225
    %v376 = vunpack.c.l.b16 %v226
    %v377 = vunpack.c.h.b16 %v226
    %v378 = vunpack.c.l.b16 %v227
    %v379 = vunpack.c.h.b16 %v227
    %v380 = vunpack.c.l.b16 %v228
    %v381 = vunpack.c.h.b16 %v228
    %v382 = vunpack.c.l.b16 %v229
    %v383 = vunpack.c.h.b16 %v229
    %v384 = vunpack.c.l.b16 %v230
    %v385 = vunpack.c.h.b16 %v230
    %v386 = vunpack.c.l.b16 %v231
    %v387 = vunpack.c.h.b16 %v231
    %v388 = vunpack.c.l.b16 %v232
    %v389 = vunpack.c.h.b16 %v232
    %v390 = vunpack.c.l.b16 %v233
    %v391 = vunpack.c.h.b16 %v233
    %v392 = vunpack.c.l.b16 %v234
    %v393 = vunpack.c.h.b16 %v234
    %v394 = vunpack.c.l.b16 %v235
    %v395 = vunpack.c.h.b16 %v235
    %v396 = vunpack.c.l.b16 %v236
    %v397 = vunpack.c.h.b16 %v236
    %v398 = vunpack.c.l.b16 %v237
    %v399 = vunpack.c.h.b16 %v237
    %v400 = vunpack.c.l.b16 %v238
    %v401 = vunpack.c.h.b16 %v238
    %v402 = vunpack.c.l.b16 %v239
    %v403 = vunpack.c.h.b16 %v239
    %v404 = vunpack.c.l.b16 %v240
    %v405 = vunpack.c.h.b16 %v240
    %v406 = vunpack.c.l.b16 %v241
    %v407 = vunpack.c.h.b16 %v241
    %v408 = vunpack.c.l.b16 %v242
    %v409 = vunpack.c.h.b16 %v242
    %v410 = vunpack.c.l.b16 %v243
    %v411 = vunpack.c.h.b16 %v243
    %v412 = vunpack.c.l.b16 %v244
    %v413 = vunpack.c.h.b16 %v244
    %v414 = vunpack.c.l.b16 %v245
    %v415 = vunpack.c.h.b16 %v245
    %v416 = vunpack.c.l.b16 %v246
    %v417 = vunpack.c.h.b16 %v246
    %v418 = vunpack.c.l.b16 %v247
    %v419 = vunpack.c.h.b16 %v247
    %v420 = vunpack.c.l.b16 %v248
    %v421 = vunpack.c.h.b16 %v248
    %v422 = vunpack.c.l.b16 %v249
    %v423 = vunpack.c.h.b16 %v249
    %v424 = vunpack.c.l.b16 %v250
    %v425 = vunpack.c.h.b16 %v250
    %v426 = vunpack.c.l.b16 %v251
    %v427 = vunpack.c.h.b16 %v251
    %v428 = vunpack.c.l.b16 %v252
    %v429 = vunpack.c.h.b16 %v252
    %v430 = vunpack.c.l.b16 %v253
    %v431 = vunpack.c.h.b16 %v253
    %v432 = vunpack.c.l.b16 %v254
    %v433 = vunpack.c.h.b16 %v254
    %v434 = vunpack.c.l.b16 %v255
    %v435 = vunpack.c.h.b16 %v255
    %v436 = vunpack.c.l.b16 %v256
    %v437 = vunpack.c.h.b16 %v256
    %v438 = vunpack.c.l.b16 %v257
    %v439 = vunpack.c.h.b16 %v257
    %v440 = vunpack.c.l.b16 %v258
    %v441 = vunpack.c.h.b16 %v258
    %v442 = vunpack.c.l.b16 %v259
    %v443 = vunpack.c.h.b16 %v259
    %v444 = vunpack.c.l.b16 %v260
    %v445 = vunpack.c.h.b16 %v260
    %v446 = vunpack.c.l.b16 %v261
    %v447 = vunpack.c.h.b16 %v261
    %v448 = vunpack.c.l.b16 %v262
    %v449 = vunpack.c.h.b16 %v262
    %v450 = vunpack.c.l.b16 %v263
    %v451 = vunpack.c.h.b16 %v263
    %v452 = vunpack.c.l.b16 %v264
    %v453 = vunpack.c.h.b16 %v264
    %v454 = vunpack.c.l.b16 %v265
    %v455 = vunpack.c.h.b16 %v265
    %v456 = vunpack.c.l.b16 %v266
    %v457 = vunpack.c.h.b16 %v266
    %v458 = vunpack.c.l.b16 %v267
    %v459 = vunpack.c.h.b16 %v267
    %v460 = vunpack.c.l.b16 %v268
    %v461 = vunpack.c.h.b16 %v268
    %v462 = vunpack.c.l.b16 %v269
    %v463 = vunpack.c.h.b16 %v269
    %v464 = vunpack.c.l.b16 %v270
    %v465 = vunpack.c.h.b16 %v270
    %v466 = vunpack.c.l.b16 %v271
    %v467 = vunpack.c.h.b16 %v271
    %v468 = vunpack.c.l.b16 %v272
    %v469 = vunpack.c.h.b16 %v272
    %v470 = vunpack.c.l.b16 %v273
    %v471 = vunpack.c.h.b16 %v273
    %v472 = vunpack.c.l.b16 %v274
    %v473 = vunpack.c.h.b16 %v274
    %v474 = vunpack.c.l.b16 %v275
    %v475 = vunpack.c.h.b16 %v275
    %v476 = vunpack.c.l.b16 %v276
    %v477 = vunpack.c.h.b16 %v276
    %v478 = vunpack.c.l.b16 %v277
    %v479 = vunpack.c.h.b16 %v277
    %v480 = vunpack.c.l.b16 %v278
    %v481 = vunpack.c.h.b16 %v278
    %v482 = vunpack.c.l.b16 %v279
    %v483 = vunpack.c.h.b16 %v279
    %v484 = vunpack.c.l.b16 %v280
    %v485 = vunpack.c.h.b16 %v280
    %v486 = vpack.c.b16 %v360, %v358
    %v487 = vpack.c.b16 %v361, %v359
    %v488 = vpack.c.b16 %v364, %v362
    %v489 = vpack.c.b16 %v365, %v363
    %v490 = vpack.c.b16 %v368, %v366
    %v491 = vpack.c.b16 %v369, %v367
    %v492 = vpack.c.b16 %v372, %v370
    %v493 = vpack.c.b16 %v373, %v371
    %v494 = vpack.c.b16 %v376, %v374
    %v495 = vpack.c.b16 %v377, %v375
    %v496 = vpack.c.b16 %v380, %v378
    %v497 = vpack.c.b16 %v381, %v379
    %v498 = vpack.c.b16 %v384, %v382
    %v499 = vpack.c.b16 %v385, %v383
    %v500 = vpack.c.b16 %v388, %v386
    %v501 = vpack.c.b16 %v389, %v387
    %v502 = vpack.c.b16 %v392, %v390
    %v503 = vpack.c.b16 %v393, %v391
    %v504 = vpack.c.b16 %v396, %v394
    %v505 = vpack.c.b16 %v397, %v395
    %v506 = vpack.c.b16 %v400, %v398
    %v507 = vpack.c.b16 %v401, %v399
    %v508 = vpack.c.b16 %v404, %v402
    %v509 = vpack.c.b16 %v405, %v403
    %v510 = vpack.c.b16 %v408, %v406
    %v511 = vpack.c.b16 %v409, %v407
    %v512 = vpack.c.b16 %v412, %v410
    %v513 = vpack.c.b16 %v413, %v411
    %v514 = vpack.c.b16 %v416, %v414
    %v515 = vpack.c.b16 %v417, %v415
    %v516 = vpack.c.b16 %v420, %v418
    %v517 = vpack.c.b16 %v421, %v419
    %v518 = vpack.c.b16 %v424, %v422
    %v519 = vpack.c.b16 %v425, %v423
    %v520 = vpack.c.b16 %v428, %v426
    %v521 = vpack.c.b16 %v429, %v427
    %v522 = vpack.c.b16 %v432, %v430
    %v523 = vpack.c.b16 %v433, %v431
    %v524 = vpack.c.b16 %v436, %v434
    %v525 = vpack.c.b16 %v437, %v435
    %v526 = vpack.c.b16 %v440, %v438
    %v527 = vpack.c.b16 %v441, %v439
    %v528 = vpack.c.b16 %v444, %v442
    %v529 = vpack.c.b16 %v445, %v443
    %v530 = vpack.c.b16 %v448, %v446
    %v531 = vpack.c.b16 %v449, %v447
    %v532 = vpack.c.b16 %v452, %v450
    %v533 = vpack.c.b16 %v453, %v451
    %v534 = vpack.c.b16 %v456, %v454
    %v535 = vpack.c.b16 %v457, %v455
    %v536 = vpack.c.b16 %v460, %v458
    %v537 = vpack.c.b16 %v461, %v459
    %v538 = vpack.c.b16 %v464, %v462
    %v539 = vpack.c.b16 %v465, %v463
    %v540 = vpack.c.b16 %v468, %v466
    %v541 = vpack.c.b16 %v469, %v467
    %v542 = vpack.c.b16 %v472, %v470
    %v543 = vpack.c.b16 %v473, %v471
    %v544 = vpack.c.b16 %v476, %v474
    %v545 = vpack.c.b16 %v477, %v475
    %v546 = vpack.c.b16 %v480, %v478
    %v547 = vpack.c.b16 %v481, %v479
    %v548 = vpack.c.b16 %v484, %v482
    %v549 = vpack.c.b16 %v485, %v483
    %614 = vmatprep.subr.bf16.mxu0 %v487
    %615 = vmatpush1.bf16.msra.mxu0 %v486
    %616 = vmatprep.subr.bf16.mxu0 %v489
    %617 = vmatpush1.bf16.msra.mxu0 %v488
    %618 = vmatprep.subr.bf16.mxu0 %v491
    %619 = vmatpush1.bf16.msra.mxu0 %v490
    %620 = vmatprep.subr.bf16.mxu0 %v493
    %621 = vmatpush1.bf16.msra.mxu0 %v492
    %622 = vmatprep.subr.bf16.mxu0 %v495
    %623 = vmatpush1.bf16.msra.mxu0 %v494
    %624 = vmatprep.subr.bf16.mxu0 %v497
    %625 = vmatpush1.bf16.msra.mxu0 %v496
    %626 = vmatprep.subr.bf16.mxu0 %v499
    %627 = vmatpush1.bf16.msra.mxu0 %v498
    %628 = vmatprep.subr.bf16.mxu0 %v501
    %629 = vmatpush1.bf16.msra.mxu0 %v500
    %630 = vmatprep.subr.bf16.mxu0 %v503
    %631 = vmatpush1.bf16.msra.mxu0 %v502
    %632 = vmatprep.subr.bf16.mxu0 %v505
    %633 = vmatpush1.bf16.msra.mxu0 %v504
    %634 = vmatprep.subr.bf16.mxu0 %v507
    %635 = vmatpush1.bf16.msra.mxu0 %v506
    %636 = vmatprep.subr.bf16.mxu0 %v509
    %637 = vmatpush1.bf16.msra.mxu0 %v508
    %638 = vmatprep.subr.bf16.mxu0 %v511
    %639 = vmatpush1.bf16.msra.mxu0 %v510
    %640 = vmatprep.subr.bf16.mxu0 %v513
    %641 = vmatpush1.bf16.msra.mxu0 %v512
    %642 = vmatprep.subr.bf16.mxu0 %v515
    %643 = vmatpush1.bf16.msra.mxu0 %v514
    %644 = vmatprep.subr.bf16.mxu0 %v517
    %645 = vmatpush1.bf16.msra.mxu0 %v516
    %646 = vmatprep.mubr.bf16.mxu0 %v214
    %647 = vmatmul.mubr.bf16.gmra.mrb[0].mxu0 %v213
    %v648 = vpop.f32.mrb[0].mxu0
    %v649 = vadd.f32 %v287, %v648
    %v650 = vpop.f32.mrb[0].mxu0
    %v651 = vadd.f32 %v291, %v650
    %v652 = vpop.f32.mrb[0].mxu0
    %v653 = vpop.f32.mrb[0].mxu0
    %654 = vdwg.mxu0
    %655 = vmatprep.subr.bf16.mxu0 %v519
    %656 = vmatpush1.bf16.msra.mxu0 %v518
    %657 = vmatprep.subr.bf16.mxu0 %v521
    %658 = vmatpush1.bf16.msra.mxu0 %v520
    %659 = vmatprep.subr.bf16.mxu0 %v523
    %660 = vmatpush1.bf16.msra.mxu0 %v522
    %661 = vmatprep.subr.bf16.mxu0 %v525
    %662 = vmatpush1.bf16.msra.mxu0 %v524
    %663 = vmatprep.subr.bf16.mxu0 %v527
    %664 = vmatpush1.bf16.msra.mxu0 %v526
    %665 = vmatprep.subr.bf16.mxu0 %v529
    %666 = vmatpush1.bf16.msra.mxu0 %v528
    %667 = vmatprep.subr.bf16.mxu0 %v531
    %668 = vmatpush1.bf16.msra.mxu0 %v530
    %669 = vmatprep.subr.bf16.mxu0 %v533
    %670 = vmatpush1.bf16.msra.mxu0 %v532
    %671 = vmatprep.subr.bf16.mxu0 %v535
    %672 = vmatpush1.bf16.msra.mxu0 %v534
    %673 = vmatprep.subr.bf16.mxu0 %v537
    %674 = vmatpush1.bf16.msra.mxu0 %v536
    %675 = vmatprep.subr.bf16.mxu0 %v539
    %676 = vmatpush1.bf16.msra.mxu0 %v538
    %677 = vmatprep.subr.bf16.mxu0 %v541
    %678 = vmatpush1.bf16.msra.mxu0 %v540
    %679 = vmatprep.subr.bf16.mxu0 %v543
    %680 = vmatpush1.bf16.msra.mxu0 %v542
    %681 = vmatprep.subr.bf16.mxu0 %v545
    %682 = vmatpush1.bf16.msra.mxu0 %v544
    %683 = vmatprep.subr.bf16.mxu0 %v547
    %684 = vmatpush1.bf16.msra.mxu0 %v546
    %685 = vmatprep.subr.bf16.mxu0 %v549
    %686 = vmatpush1.bf16.msra.mxu0 %v548
    %687 = vmatprep.mubr.bf16.mxu0 %v216
    %688 = vmatmul.mubr.bf16.gmra.mrb[0].mxu0 %v215
    %v689 = vpop.f32.mrb[0].mxu0
    %v690 = vadd.f32 %v649, %v689
    %v691 = vpop.f32.mrb[0].mxu0
    %v692 = vadd.f32 %v651, %v691
    %v693 = vpop.f32.mrb[0].mxu0
    %v694 = vpop.f32.mrb[0].mxu0
    %695 = vdwg.mxu0
    %v696 = vmax.f32 %v690, 0.0
    %v697 = vmax.f32 %v692, 0.0
    %v698 = vpack.c.bf16 %v696, %v696
    %v699 = vpack.c.bf16 %v697, %v697
    %v700 = vld [vmem:[#allocation7] sm:$0xf]
    %v701 = vld [vmem:[#allocation7 + $0x4] sm:$0xf]
    %v702 = vld [vmem:[#allocation7 + $0x8] sm:$0xf]
    %v703 = vld [vmem:[#allocation7 + $0xc] sm:$0xf]
    %v704 = vld [vmem:[#allocation7 + $0x10] sm:$0xf]
    %v705 = vld [vmem:[#allocation7 + $0x14] sm:$0xf]
    %v706 = vld [vmem:[#allocation7 + $0x18] sm:$0xf]
    %v707 = vld [vmem:[#allocation7 + $0x1c] sm:$0xf]
    %v708 = vld [vmem:[#allocation7 + $0x20] sm:$0xf]
    %v709 = vld [vmem:[#allocation7 + $0x24] sm:$0xf]
    %v710 = vld [vmem:[#allocation7 + $0x28] sm:$0xf]
    %v711 = vld [vmem:[#allocation7 + $0x2c] sm:$0xf]
    %v712 = vld [vmem:[#allocation7 + $0x30] sm:$0xf]
    %v713 = vld [vmem:[#allocation7 + $0x34] sm:$0xf]
    %v714 = vld [vmem:[#allocation7 + $0x38] sm:$0xf]
    %v715 = vld [vmem:[#allocation7 + $0x3c] sm:$0xf]
    %v716 = vld [vmem:[#allocation7 + $0x40] sm:$0xf]
    %v717 = vld [vmem:[#allocation7 + $0x44] sm:$0xf]
    %v718 = vld [vmem:[#allocation7 + $0x48] sm:$0xf]
    %v719 = vld [vmem:[#allocation7 + $0x4c] sm:$0xf]
    %v720 = vld [vmem:[#allocation7 + $0x50] sm:$0xf]
    %v721 = vld [vmem:[#allocation7 + $0x54] sm:$0xf]
    %v722 = vld [vmem:[#allocation7 + $0x58] sm:$0xf]
    %v723 = vld [vmem:[#allocation7 + $0x5c] sm:$0xf]
    %v724 = vld [vmem:[#allocation7 + $0x60] sm:$0xf]
    %v725 = vld [vmem:[#allocation7 + $0x64] sm:$0xf]
    %v726 = vld [vmem:[#allocation7 + $0x68] sm:$0xf]
    %v727 = vld [vmem:[#allocation7 + $0x6c] sm:$0xf]
    %v728 = vld [vmem:[#allocation7 + $0x70] sm:$0xf]
    %v729 = vld [vmem:[#allocation7 + $0x74] sm:$0xf]
    %v730 = vld [vmem:[#allocation7 + $0x78] sm:$0xf]
    %v731 = vld [vmem:[#allocation7 + $0x7c] sm:$0xf]
    %v732 = vld [vmem:[#allocation8 + $0x2] ss:$0 sm:$0xff]
    %v765 = vunpack.c.l.b16 %v700
    %v766 = vunpack.c.l.b16 %v701
    %v767 = vunpack.c.l.b16 %v702
    %v768 = vunpack.c.l.b16 %v703
    %v769 = vunpack.c.l.b16 %v704
    %v770 = vunpack.c.l.b16 %v705
    %v771 = vunpack.c.l.b16 %v706
    %v772 = vunpack.c.l.b16 %v707
    %v773 = vunpack.c.l.b16 %v708
    %v774 = vunpack.c.l.b16 %v709
    %v775 = vunpack.c.l.b16 %v710
    %v776 = vunpack.c.l.b16 %v711
    %v777 = vunpack.c.l.b16 %v712
    %v778 = vunpack.c.l.b16 %v713
    %v779 = vunpack.c.l.b16 %v714
    %v780 = vunpack.c.l.b16 %v715
    %v781 = vunpack.c.l.b16 %v716
    %v782 = vunpack.c.l.b16 %v717
    %v783 = vunpack.c.l.b16 %v718
    %v784 = vunpack.c.l.b16 %v719
    %v785 = vunpack.c.l.b16 %v720
    %v786 = vunpack.c.l.b16 %v721
    %v787 = vunpack.c.l.b16 %v722
    %v788 = vunpack.c.l.b16 %v723
    %v789 = vunpack.c.l.b16 %v724
    %v790 = vunpack.c.l.b16 %v725
    %v791 = vunpack.c.l.b16 %v726
    %v792 = vunpack.c.l.b16 %v727
    %v793 = vunpack.c.l.b16 %v728
    %v794 = vunpack.c.l.b16 %v729
    %v795 = vunpack.c.l.b16 %v730
    %v796 = vunpack.c.l.b16 %v731
    %v797 = vpack.c.b16 %v766, %v765
    %v798 = vpack.c.b16 %v768, %v767
    %v799 = vpack.c.b16 %v770, %v769
    %v800 = vpack.c.b16 %v772, %v771
    %v801 = vpack.c.b16 %v774, %v773
    %v802 = vpack.c.b16 %v776, %v775
    %v803 = vpack.c.b16 %v778, %v777
    %v804 = vpack.c.b16 %v780, %v779
    %v805 = vpack.c.b16 %v782, %v781
    %v806 = vpack.c.b16 %v784, %v783
    %v807 = vpack.c.b16 %v786, %v785
    %v808 = vpack.c.b16 %v788, %v787
    %v809 = vpack.c.b16 %v790, %v789
    %v810 = vpack.c.b16 %v792, %v791
    %v811 = vpack.c.b16 %v794, %v793
    %v812 = vpack.c.b16 %v796, %v795
    %829 = vmatprep.subr.bf16.mxu0 0
    %830 = vmatpush1.bf16.msra.mxu0 %v797
    %831 = vmatprep.subr.bf16.mxu0 0
    %832 = vmatpush1.bf16.msra.mxu0 %v798
    %833 = vmatprep.subr.bf16.mxu0 0
    %834 = vmatpush1.bf16.msra.mxu0 %v799
    %835 = vmatprep.subr.bf16.mxu0 0
    %836 = vmatpush1.bf16.msra.mxu0 %v800
    %837 = vmatprep.subr.bf16.mxu0 0
    %838 = vmatpush1.bf16.msra.mxu0 %v801
    %839 = vmatprep.subr.bf16.mxu0 0
    %840 = vmatpush1.bf16.msra.mxu0 %v802
    %841 = vmatprep.subr.bf16.mxu0 0
    %842 = vmatpush1.bf16.msra.mxu0 %v803
    %843 = vmatprep.subr.bf16.mxu0 0
    %844 = vmatpush1.bf16.msra.mxu0 %v804
    %845 = vmatprep.subr.bf16.mxu0 0
    %846 = vmatpush1.bf16.msra.mxu0 %v805
    %847 = vmatprep.subr.bf16.mxu0 0
    %848 = vmatpush1.bf16.msra.mxu0 %v806
    %849 = vmatprep.subr.bf16.mxu0 0
    %850 = vmatpush1.bf16.msra.mxu0 %v807
    %851 = vmatprep.subr.bf16.mxu0 0
    %852 = vmatpush1.bf16.msra.mxu0 %v808
    %853 = vmatprep.subr.bf16.mxu0 0
    %854 = vmatpush1.bf16.msra.mxu0 %v809
    %855 = vmatprep.subr.bf16.mxu0 0
    %856 = vmatpush1.bf16.msra.mxu0 %v810
    %857 = vmatprep.subr.bf16.mxu0 0
    %858 = vmatpush1.bf16.msra.mxu0 %v811
    %859 = vmatprep.subr.bf16.mxu0 0
    %860 = vmatpush1.bf16.msra.mxu0 %v812
    %861 = vmatprep.mubr.bf16.mxu0 %v699
    %862 = vmatmul.mubr.bf16.gmra.mrb[0].mxu0 %v698
    %v863 = vpop.f32.mrb[0].mxu0
    %v864 = vadd.f32 %v732, %v863
    %v865 = vpop.f32.mrb[0].mxu0
    %v866 = vpop.f32.mrb[0].mxu0
    %v867 = vpop.f32.mrb[0].mxu0
    %868 = vdwg.mxu0
    %v869 = vmax.f32 %v864, 0.0
    %v870 = vpack.c.bf16 %v869, %v869
    %v871 = vld [vmem:[#allocation7 + $0x80] sm:$0xf]
    %v872 = vld [vmem:[#allocation7 + $0x84] sm:$0xf]
    %v873 = vld [vmem:[#allocation7 + $0x88] sm:$0xf]
    %v874 = vld [vmem:[#allocation7 + $0x8c] sm:$0xf]
    %v875 = vld [vmem:[#allocation7 + $0x90] sm:$0xf]
    %v876 = vld [vmem:[#allocation7 + $0x94] sm:$0xf]
    %v877 = vld [vmem:[#allocation7 + $0x98] sm:$0xf]
    %v878 = vld [vmem:[#allocation7 + $0x9c] sm:$0xf]
    %v879 = vld [vmem:[#allocation7 + $0xa0] sm:$0xf]
    %v880 = vld [vmem:[#allocation7 + $0xa4] sm:$0xf]
    %v881 = vld [vmem:[#allocation7 + $0xa8] sm:$0xf]
    %v882 = vld [vmem:[#allocation7 + $0xac] sm:$0xf]
    %v883 = vld [vmem:[#allocation7 + $0xb0] sm:$0xf]
    %v884 = vld [vmem:[#allocation7 + $0xb4] sm:$0xf]
    %v885 = vld [vmem:[#allocation7 + $0xb8] sm:$0xf]
    %v886 = vld [vmem:[#allocation7 + $0xbc] sm:$0xf]
    %v887 = vld [vmem:[#allocation8 + $0x3] ss:$0 sm:$0xff]
    %v904 = vunpack.c.l.b16 %v871
    %v905 = vunpack.c.l.b16 %v872
    %v906 = vunpack.c.l.b16 %v873
    %v907 = vunpack.c.l.b16 %v874
    %v908 = vunpack.c.l.b16 %v875
    %v909 = vunpack.c.l.b16 %v876
    %v910 = vunpack.c.l.b16 %v877
    %v911 = vunpack.c.l.b16 %v878
    %v912 = vunpack.c.l.b16 %v879
    %v913 = vunpack.c.l.b16 %v880
    %v914 = vunpack.c.l.b16 %v881
    %v915 = vunpack.c.l.b16 %v882
    %v916 = vunpack.c.l.b16 %v883
    %v917 = vunpack.c.l.b16 %v884
    %v918 = vunpack.c.l.b16 %v885
    %v919 = vunpack.c.l.b16 %v886
    %v920 = vpack.c.b16 %v905, %v904
    %v921 = vpack.c.b16 %v907, %v906
    %v922 = vpack.c.b16 %v909, %v908
    %v923 = vpack.c.b16 %v911, %v910
    %v924 = vpack.c.b16 %v913, %v912
    %v925 = vpack.c.b16 %v915, %v914
    %v926 = vpack.c.b16 %v917, %v916
    %v927 = vpack.c.b16 %v919, %v918
    %936 = vmatprep.subr.bf16.mxu0 0
    %937 = vmatpush1.bf16.msra.mxu0 %v920
    %938 = vmatprep.subr.bf16.mxu0 0
    %939 = vmatpush1.bf16.msra.mxu0 %v921
    %940 = vmatprep.subr.bf16.mxu0 0
    %941 = vmatpush1.bf16.msra.mxu0 %v922
    %942 = vmatprep.subr.bf16.mxu0 0
    %943 = vmatpush1.bf16.msra.mxu0 %v923
    %944 = vmatprep.subr.bf16.mxu0 0
    %945 = vmatpush1.bf16.msra.mxu0 %v924
    %946 = vmatprep.subr.bf16.mxu0 0
    %947 = vmatpush1.bf16.msra.mxu0 %v925
    %948 = vmatprep.subr.bf16.mxu0 0
    %949 = vmatpush1.bf16.msra.mxu0 %v926
    %950 = vmatprep.subr.bf16.mxu0 0
    %951 = vmatpush1.bf16.msra.mxu0 %v927
    %952 = vmatprep.subr.bf16.mxu0 0
    %953 = vmatpush1.bf16.msra.mxu0 0
    %954 = vmatprep.subr.bf16.mxu0 0
    %955 = vmatpush1.bf16.msra.mxu0 0
    %956 = vmatprep.subr.bf16.mxu0 0
    %957 = vmatpush1.bf16.msra.mxu0 0
    %958 = vmatprep.subr.bf16.mxu0 0
    %959 = vmatpush1.bf16.msra.mxu0 0
    %960 = vmatprep.subr.bf16.mxu0 0
    %961 = vmatpush1.bf16.msra.mxu0 0
    %962 = vmatprep.subr.bf16.mxu0 0
    %963 = vmatpush1.bf16.msra.mxu0 0
    %964 = vmatprep.subr.bf16.mxu0 0
    %965 = vmatpush1.bf16.msra.mxu0 0
    %966 = vmatprep.subr.bf16.mxu0 0
    %967 = vmatpush1.bf16.msra.mxu0 0
    %968 = vmatprep.mubr.bf16.mxu0 0
    %969 = vmatmul.mubr.bf16.gmra.mrb[0].mxu0 %v870
    %v970 = vpop.f32.mrb[0].mxu0
    %v971 = vadd.f32 %v887, %v970
    %v972 = vpop.f32.mrb[0].mxu0
    %v973 = vpop.f32.mrb[0].mxu0
    %v974 = vpop.f32.mrb[0].mxu0
    %975 = vdwg.mxu0
    %v976 = vmax.f32 %v971, 0.0
    %v977 = vpack.c.bf16 %v976, %v976
    %v978 = vld [vmem:[#allocation7 + $0xc0] sm:$0xf]
    %v979 = vld [vmem:[#allocation7 + $0xc4] sm:$0xf]
    %v980 = vld [vmem:[#allocation7 + $0xc8] sm:$0xf]
    %v981 = vld [vmem:[#allocation7 + $0xcc] sm:$0xf]
    %v982 = vld [vmem:[#allocation7 + $0xd0] sm:$0xf]
    %v983 = vld [vmem:[#allocation7 + $0xd4] sm:$0xf]
    %v984 = vld [vmem:[#allocation7 + $0xd8] sm:$0xf]
    %v985 = vld [vmem:[#allocation7 + $0xdc] sm:$0xf]
    %v986 = vld [vmem:[#allocation7 + $0xe0] sm:$0xf]
    %v987 = vld [vmem:[#allocation7 + $0xe4] sm:$0xf]
    %v988 = vld [vmem:[#allocation7 + $0xe8] sm:$0xf]
    %v989 = vld [vmem:[#allocation7 + $0xec] sm:$0xf]
    %v990 = vld [vmem:[#allocation7 + $0xf0] sm:$0xf]
    %v991 = vld [vmem:[#allocation7 + $0xf4] sm:$0xf]
    %v992 = vld [vmem:[#allocation7 + $0xf8] sm:$0xf]
    %v993 = vld [vmem:[#allocation7 + $0xfc] sm:$0xf]
    %v994 = vld [vmem:[#allocation8 + $0x4] ss:$0 sm:$0xff]
    %v1011 = vunpack.c.l.b16 %v978
    %v1012 = vunpack.c.l.b16 %v979
    %v1013 = vunpack.c.l.b16 %v980
    %v1014 = vunpack.c.l.b16 %v981
    %v1015 = vunpack.c.l.b16 %v982
    %v1016 = vunpack.c.l.b16 %v983
    %v1017 = vunpack.c.l.b16 %v984
    %v1018 = vunpack.c.l.b16 %v985
    %v1019 = vunpack.c.l.b16 %v986
    %v1020 = vunpack.c.l.b16 %v987
    %v1021 = vunpack.c.l.b16 %v988
    %v1022 = vunpack.c.l.b16 %v989
    %v1023 = vunpack.c.l.b16 %v990
    %v1024 = vunpack.c.l.b16 %v991
    %v1025 = vunpack.c.l.b16 %v992
    %v1026 = vunpack.c.l.b16 %v993
    %v1027 = vpack.c.b16 %v1012, %v1011
    %v1028 = vpack.c.b16 %v1014, %v1013
    %v1029 = vpack.c.b16 %v1016, %v1015
    %v1030 = vpack.c.b16 %v1018, %v1017
    %v1031 = vpack.c.b16 %v1020, %v1019
    %v1032 = vpack.c.b16 %v1022, %v1021
    %v1033 = vpack.c.b16 %v1024, %v1023
    %v1034 = vpack.c.b16 %v1026, %v1025
    %1043 = vmatprep.subr.bf16.mxu0 0
    %1044 = vmatpush1.bf16.msra.mxu0 %v1027
    %1045 = vmatprep.subr.bf16.mxu0 0
    %1046 = vmatpush1.bf16.msra.mxu0 %v1028
    %1047 = vmatprep.subr.bf16.mxu0 0
    %1048 = vmatpush1.bf16.msra.mxu0 %v1029
    %1049 = vmatprep.subr.bf16.mxu0 0
    %1050 = vmatpush1.bf16.msra.mxu0 %v1030
    %1051 = vmatprep.subr.bf16.mxu0 0
    %1052 = vmatpush1.bf16.msra.mxu0 %v1031
    %1053 = vmatprep.subr.bf16.mxu0 0
    %1054 = vmatpush1.bf16.msra.mxu0 %v1032
    %1055 = vmatprep.subr.bf16.mxu0 0
    %1056 = vmatpush1.bf16.msra.mxu0 %v1033
    %1057 = vmatprep.subr.bf16.mxu0 0
    %1058 = vmatpush1.bf16.msra.mxu0 %v1034
    %1059 = vmatprep.subr.bf16.mxu0 0
    %1060 = vmatpush1.bf16.msra.mxu0 0
    %1061 = vmatprep.subr.bf16.mxu0 0
    %1062 = vmatpush1.bf16.msra.mxu0 0
    %1063 = vmatprep.subr.bf16.mxu0 0
    %1064 = vmatpush1.bf16.msra.mxu0 0
    %1065 = vmatprep.subr.bf16.mxu0 0
    %1066 = vmatpush1.bf16.msra.mxu0 0
    %1067 = vmatprep.subr.bf16.mxu0 0
    %1068 = vmatpush1.bf16.msra.mxu0 0
    %1069 = vmatprep.subr.bf16.mxu0 0
    %1070 = vmatpush1.bf16.msra.mxu0 0
    %1071 = vmatprep.subr.bf16.mxu0 0
    %1072 = vmatpush1.bf16.msra.mxu0 0
    %1073 = vmatprep.subr.bf16.mxu0 0
    %1074 = vmatpush1.bf16.msra.mxu0 0
    %1075 = vmatprep.mubr.bf16.mxu0 0
    %1076 = vmatmul.mubr.bf16.gmra.mrb[0].mxu0 %v977
    %v1077 = vpop.f32.mrb[0].mxu0
    %v1078 = vadd.f32 %v994, %v1077
    %v1079 = vpop.f32.mrb[0].mxu0
    %v1080 = vpop.f32.mrb[0].mxu0
    %v1081 = vpop.f32.mrb[0].mxu0
    %1082 = vdwg.mxu0
    %v1083 = vmax.f32 %v1078, 0.0
    %v1084 = vpack.c.bf16 %v1083, %v1083
    %v1085 = vld [vmem:[#allocation7 + $0x100] sm:$0xf]
    %v1086 = vld [vmem:[#allocation7 + $0x104] sm:$0xf]
    %v1087 = vld [vmem:[#allocation7 + $0x108] sm:$0xf]
    %v1088 = vld [vmem:[#allocation7 + $0x10c] sm:$0xf]
    %v1089 = vld [vmem:[#allocation7 + $0x110] sm:$0xf]
    %v1090 = vld [vmem:[#allocation7 + $0x114] sm:$0xf]
    %v1091 = vld [vmem:[#allocation7 + $0x118] sm:$0xf]
    %v1092 = vld [vmem:[#allocation7 + $0x11c] sm:$0xf]
    %v1093 = vld [vmem:[#allocation7 + $0x120] sm:$0xf]
    %v1094 = vld [vmem:[#allocation7 + $0x124] sm:$0xf]
    %v1095 = vld [vmem:[#allocation7 + $0x128] sm:$0xf]
    %v1096 = vld [vmem:[#allocation7 + $0x12c] sm:$0xf]
    %v1097 = vld [vmem:[#allocation7 + $0x130] sm:$0xf]
    %v1098 = vld [vmem:[#allocation7 + $0x134] sm:$0xf]
    %v1099 = vld [vmem:[#allocation7 + $0x138] sm:$0xf]
    %v1100 = vld [vmem:[#allocation7 + $0x13c] sm:$0xf]
    %v1101 = vld [vmem:[#allocation8 + $0x5] ss:$0 sm:$0xff]
    %v1118 = vunpack.c.l.b16 %v1085
    %v1119 = vunpack.c.l.b16 %v1086
    %v1120 = vunpack.c.l.b16 %v1087
    %v1121 = vunpack.c.l.b16 %v1088
    %v1122 = vunpack.c.l.b16 %v1089
    %v1123 = vunpack.c.l.b16 %v1090
    %v1124 = vunpack.c.l.b16 %v1091
    %v1125 = vunpack.c.l.b16 %v1092
    %v1126 = vunpack.c.l.b16 %v1093
    %v1127 = vunpack.c.l.b16 %v1094
    %v1128 = vunpack.c.l.b16 %v1095
    %v1129 = vunpack.c.l.b16 %v1096
    %v1130 = vunpack.c.l.b16 %v1097
    %v1131 = vunpack.c.l.b16 %v1098
    %v1132 = vunpack.c.l.b16 %v1099
    %v1133 = vunpack.c.l.b16 %v1100
    %v1134 = vpack.c.b16 %v1119, %v1118
    %v1135 = vpack.c.b16 %v1121, %v1120
    %v1136 = vpack.c.b16 %v1123, %v1122
    %v1137 = vpack.c.b16 %v1125, %v1124
    %v1138 = vpack.c.b16 %v1127, %v1126
    %v1139 = vpack.c.b16 %v1129, %v1128
    %v1140 = vpack.c.b16 %v1131, %v1130
    %v1141 = vpack.c.b16 %v1133, %v1132
    %1150 = vmatprep.subr.bf16.mxu0 0
    %1151 = vmatpush1.bf16.msra.mxu0 %v1134
    %1152 = vmatprep.subr.bf16.mxu0 0
    %1153 = vmatpush1.bf16.msra.mxu0 %v1135
    %1154 = vmatprep.subr.bf16.mxu0 0
    %1155 = vmatpush1.bf16.msra.mxu0 %v1136
    %1156 = vmatprep.subr.bf16.mxu0 0
    %1157 = vmatpush1.bf16.msra.mxu0 %v1137
    %1158 = vmatprep.subr.bf16.mxu0 0
    %1159 = vmatpush1.bf16.msra.mxu0 %v1138
    %1160 = vmatprep.subr.bf16.mxu0 0
    %1161 = vmatpush1.bf16.msra.mxu0 %v1139
    %1162 = vmatprep.subr.bf16.mxu0 0
    %1163 = vmatpush1.bf16.msra.mxu0 %v1140
    %1164 = vmatprep.subr.bf16.mxu0 0
    %1165 = vmatpush1.bf16.msra.mxu0 %v1141
    %1166 = vmatprep.subr.bf16.mxu0 0
    %1167 = vmatpush1.bf16.msra.mxu0 0
    %1168 = vmatprep.subr.bf16.mxu0 0
    %1169 = vmatpush1.bf16.msra.mxu0 0
    %1170 = vmatprep.subr.bf16.mxu0 0
    %1171 = vmatpush1.bf16.msra.mxu0 0
    %1172 = vmatprep.subr.bf16.mxu0 0
    %1173 = vmatpush1.bf16.msra.mxu0 0
    %1174 = vmatprep.subr.bf16.mxu0 0
    %1175 = vmatpush1.bf16.msra.mxu0 0
    %1176 = vmatprep.subr.bf16.mxu0 0
    %1177 = vmatpush1.bf16.msra.mxu0 0
    %1178 = vmatprep.subr.bf16.mxu0 0
    %1179 = vmatpush1.bf16.msra.mxu0 0
    %1180 = vmatprep.subr.bf16.mxu0 0
    %1181 = vmatpush1.bf16.msra.mxu0 0
    %1182 = vmatprep.mubr.bf16.mxu0 0
    %1183 = vmatmul.mubr.bf16.gmra.mrb[0].mxu0 %v1084
    %v1184 = vpop.f32.mrb[0].mxu0
    %v1185 = vadd.f32 %v1101, %v1184
    %v1186 = vpop.f32.mrb[0].mxu0
    %v1187 = vpop.f32.mrb[0].mxu0
    %v1188 = vpop.f32.mrb[0].mxu0
    %1189 = vdwg.mxu0
    %1190 = vst [vmem:[#allocation10] sm:$0xff] %v1185
    // Predicated region
    $region38: #{qnetwork_forward.1} parent=1 // pred_check
      _
    $region39: #{qnetwork_forward.1} parent=1 // pred_check_branch
      %1192 = sbr.rel (0) target = $region41
    $region40: #{qnetwork_forward.1} parent=1 // pred_region
      %s1194 = ssub.s32 128, 32
      %1195 = vsyncadd [#allocation4], %s1194
      %s1196 = sshll.u32 [#allocation10], 4
      %s1197 = int_to_ptr.vmem [resolvable:$true] %s1196
      %1202 = dma.vmem_to_hbm [thread:$0]  %s1197, 32, %s5, [#allocation4], 32, 32, 2
    $region41: #{qnetwork_forward.1} parent=1 // pred_fallthru
      _
    // Predicated region
    $region42: #{qnetwork_forward.1} parent=1 // pred_check
      _
    $region43: #{qnetwork_forward.1} parent=1 // pred_check_branch
      %1204 = sbr.rel (0) target = $region45
    $region44: #{qnetwork_forward.1} parent=1 // pred_region
      %1205 = dma.done [#allocation4], 128
    $region45: #{qnetwork_forward.1} parent=1 // pred_fallthru
      _
    %1206 = vsyncpa [#allocation3], 1
    %1207 = vsyncpa [#allocation6], 1
    %1208 = vsyncpa [#allocation9], 1
    %1209 = vsyncpa [#allocation4], 1

</llo_original>
